<compile_context>
chip_gen: v7x
topology: tpu7x:2x2x1
jax: 0.10.0
libtpu: 0.0.40
codegen_flags: <defaults>
</compile_context>

<pallas_src>
import jax
import jax.numpy as jnp
from jax.experimental import pallas as pl
from jax.experimental.pallas import tpu as pltpu


# ---------------------------------------------------------------------------
# Kernels
# ---------------------------------------------------------------------------

def _cat_copy_kernel(x_ref, o_ref):
    # 'cat_wo_avg': pure relayout; view axis unrolled, one contiguous output slab.
    V, _, D = x_ref.shape
    for v in range(V):  # V is tiny; static unroll
        o_ref[:, v * D:(v + 1) * D] = x_ref[v]


def _weighted_cat_kernel(x_ref, thr_ref, o_ref):
    # 'cat_w_avg': out[:, v*D:(v+1)*D] = features[v] * thr[v]  (thr from SMEM)
    V, _, D = x_ref.shape
    for v in range(V):
        o_ref[:, v * D:(v + 1) * D] = x_ref[v] * thr_ref[v]


def _add_kernel(x_ref, o_ref):
    # 'add_wo_avg': out = sum_v features[v]; accumulate in registers, single store.
    V = x_ref.shape[0]
    acc = x_ref[0]
    for v in range(1, V):
        acc = acc + x_ref[v]
    o_ref[...] = acc


def _weighted_add_kernel(x_ref, thr_ref, o_ref):
    # 'add_w_avg': out = sum_v features[v] * thr[v]
    V = x_ref.shape[0]
    acc = x_ref[0] * thr_ref[0]
    for v in range(1, V):
        acc = acc + x_ref[v] * thr_ref[v]
    o_ref[...] = acc


def _mlp_kernel(feat_ref, thr_ref, w1_ref, b1_ref, g_ref, be_ref, w2_ref, b2_ref,
                o_ref, xcat_ref):
    # 'cat_w_avg_mlp' / 'cat_wo_avg_mlp':
    #   x = (transpose(features,0,1) * thr).reshape(B, V*D)
    #   y = Linear2(Dropout(ReLU(BatchNorm1d(Linear1(x)))))
    # The lane-axis concat is materialised once in a tiny bf16 VMEM scratch so
    # the first matmul is a single K=V*D MXU push (better systolic fill on
    # v6e/v7x than V separate K=D matmuls).
    V, B, D = feat_ref.shape

    for v in range(V):  # static unroll; V is tiny
        xcat_ref[:, v * D:(v + 1) * D] = (feat_ref[v] * thr_ref[v]).astype(jnp.bfloat16)

    h = jnp.dot(xcat_ref[...], w1_ref[...],
                preferred_element_type=jnp.float32) + b1_ref[...]

    # BatchNorm1d training-mode forward (batch statistics, biased variance),
    # two-pass centered variance in f32 to avoid E[x^2]-mean^2 cancellation.
    inv_b = 1.0 / B
    mean = jnp.sum(h, axis=0, keepdims=True) * inv_b
    hc = h - mean
    var = jnp.sum(hc * hc, axis=0, keepdims=True) * inv_b
    hn = hc * jax.lax.rsqrt(var + 1e-5) * g_ref[...] + be_ref[...]
    # TODO(synk): eval-mode BatchNorm (running_mean/running_var) is not implemented;
    # this is the training-mode (batch-stats) forward.
    hr = jnp.maximum(hn, 0.0)  # ReLU
    # TODO(synk): train-mode Dropout is stochastic; treated as identity (eval semantics).

    o_ref[...] = (jnp.dot(hr.astype(jnp.bfloat16), w2_ref[...],
                          preferred_element_type=jnp.float32) + b2_ref[...])
    # NOTE: with tiny batches the MXU is M-starved (B rows of a 128/256-row
    # systolic array); caller-side batching of node groups is the only real fix.


# ---------------------------------------------------------------------------
# Wrappers (pallas_call plumbing)
# ---------------------------------------------------------------------------

def _batch_tile(B, max_tb=1024):
    # Largest batch tile that keeps blocks legal: either the whole batch
    # (tb == B, full-dim block) or a 1024-row multiple-of-8 tile (bigger tiles
    # amortize the ~600-cycle per-step overhead; 2 bufs x V*tb*D*4 stays well
    # under even v7x's 64 MiB VMEM at these dims).  Ragged tail blocks are
    # padded/masked by Pallas, safe for these elementwise kernels.
    return B if B <= max_tb else max_tb


def _smem_spec():
    return pl.BlockSpec(memory_space=pltpu.MemorySpace.SMEM)


def _vmem_spec():
    return pl.BlockSpec(memory_space=pltpu.MemorySpace.VMEM)


def _cat_call(kernel, features, extra_inputs, extra_specs):
    V, B, D = features.shape
    tb = _batch_tile(B)
    return pl.pallas_call(
        kernel,
        out_shape=jax.ShapeDtypeStruct((B, V * D), features.dtype),
        grid=(pl.cdiv(B, tb),),
        in_specs=[pl.BlockSpec((V, tb, D), lambda i: (0, i, 0))] + extra_specs,
        out_specs=pl.BlockSpec((tb, V * D), lambda i: (i, 0)),
        compiler_params=pltpu.CompilerParams(
            dimension_semantics=("parallel",)),
    )(features, *extra_inputs)


def _add_call(kernel, features, extra_inputs, extra_specs):
    V, B, D = features.shape
    tb = _batch_tile(B)
    return pl.pallas_call(
        kernel,
        out_shape=jax.ShapeDtypeStruct((B, D), features.dtype),
        grid=(pl.cdiv(B, tb),),
        in_specs=[pl.BlockSpec((V, tb, D), lambda i: (0, i, 0))] + extra_specs,
        out_specs=pl.BlockSpec((tb, D), lambda i: (i, 0)),
        compiler_params=pltpu.CompilerParams(
            dimension_semantics=("parallel",)),
    )(features, *extra_inputs)


def cat_concat(features):
    return _cat_call(_cat_copy_kernel, features, (), [])


def cat_weighted(features, thr):
    return _cat_call(_weighted_cat_kernel, features, (thr,), [_smem_spec()])


def add_plain(features):
    return _add_call(_add_kernel, features, (), [])


def add_weighted(features, thr):
    return _add_call(_weighted_add_kernel, features, (thr,), [_smem_spec()])


def prepare_mlp_params(params):
    """One-time (off the hot path) prep: cast MXU weights to bf16 once so every
    mlp_forward call doesn't pay an extra HBM read/write pair for the cast."""
    p = dict(params)
    p["w1"] = params["w1"].astype(jnp.bfloat16)
    p["w2"] = params["w2"].astype(jnp.bfloat16)
    return p


def mlp_forward(features, thr, params):
    # Gridless whole-array call: BatchNorm needs full-batch statistics and the
    # problem is small, so everything lives in VMEM as single blocks.
    V, B, D = features.shape
    H = params["w1"].shape[1]
    O = params["w2"].shape[1]

    # Weights should already be bf16 (prepare_mlp_params); fall back to an
    # in-graph cast only if the caller passed f32.
    w1 = params["w1"] if params["w1"].dtype == jnp.bfloat16 else params["w1"].astype(jnp.bfloat16)
    w2 = params["w2"] if params["w2"].dtype == jnp.bfloat16 else params["w2"].astype(jnp.bfloat16)

    # Explicit (but tight) VMEM budget: 2x working set, no artificial 32 MiB
    # floor, so we don't steal scoped VMEM headroom on v7x (64 MiB physical).
    need = (V * B * D * 4            # features block
            + (V * D) * H * 2        # w1 bf16
            + H * O * 2              # w2 bf16
            + 3 * H * 4 + O * 4      # b1, gamma, beta, b2
            + B * O * 4              # output
            + B * (V * D) * 2        # x_cat scratch (bf16)
            + 4 * B * H * 4)         # f32 temporaries (h, hc, hn, hr)
    vmem_limit = int(min(max(2 * need, 4 * 2 ** 20), 48 * 2 ** 20))
    # TODO(synk): once W1 (V*D x H bf16) approaches ~8-16 MiB (v7x's smaller
    # VMEM), switch to an H-tiled grid with an f32 accumulator scratch and a
    # two-pass/column-tiled BatchNorm instead of this gridless spec.

    return pl.pallas_call(
        _mlp_kernel,
        out_shape=jax.ShapeDtypeStruct((B, O), jnp.float32),
        in_specs=[_vmem_spec(), _smem_spec(), _vmem_spec(), _vmem_spec(),
                  _vmem_spec(), _vmem_spec(), _vmem_spec(), _vmem_spec()],
        out_specs=_vmem_spec(),
        scratch_shapes=[pltpu.VMEM((B, V * D), jnp.bfloat16)],
        compiler_params=pltpu.CompilerParams(vmem_limit_bytes=vmem_limit),
    )(features, thr, w1, params["b1"], params["gamma"], params["beta"],
      w2, params["b2"])


def inter_agg(features, thresholds, inter_opt, params=None):
    """JAX/Pallas equivalent of Inter_AGG.forward.

    features:   (V, B, D) float32  (stacked per-relation node features)
    thresholds: (V, 1)    float32
    """
    V, B, D = features.shape
    thr = thresholds.reshape(V).astype(features.dtype)

    if inter_opt == "cat_wo_avg":
        return cat_concat(features)
    elif inter_opt == "cat_w_avg":
        return cat_weighted(features, thr)
    elif inter_opt in ("cat_w_avg_mlp", "cat_wo_avg_mlp"):
        # NB: the reference PyTorch code multiplies by thresholds in BOTH mlp branches.
        return mlp_forward(features, thr, params)
    elif inter_opt == "add_wo_avg":
        return add_plain(features)
    elif inter_opt == "add_w_avg":
        return add_weighted(features, thr)
    else:
        raise ValueError(f"unknown inter_opt: {inter_opt}")


# ---------------------------------------------------------------------------
# Pure-JAX reference (f32, for sanity checking)
# ---------------------------------------------------------------------------

def inter_agg_ref(features, thresholds, inter_opt, params=None):
    V, B, D = features.shape
    f = jnp.transpose(features, (1, 0, 2))  # (B, V, D)
    if inter_opt == "cat_wo_avg":
        return f.reshape(B, -1)
    if inter_opt == "cat_w_avg":
        return (f * thresholds.reshape(1, V, 1)).reshape(B, -1)
    if inter_opt in ("cat_w_avg_mlp", "cat_wo_avg_mlp"):
        x = (f * thresholds.reshape(1, V, 1)).reshape(B, -1)
        h = x @ params["w1"] + params["b1"]
        mean = jnp.mean(h, axis=0, keepdims=True)
        var = jnp.mean((h - mean) ** 2, axis=0, keepdims=True)
        hn = (h - mean) / jnp.sqrt(var + 1e-5) * params["gamma"] + params["beta"]
        hr = jnp.maximum(hn, 0.0)
        return hr @ params["w2"] + params["b2"]
    if inter_opt == "add_wo_avg":
        return f.sum(axis=1)
    if inter_opt == "add_w_avg":
        return (f * thresholds.reshape(1, V, 1)).sum(axis=1)
    raise ValueError(inter_opt)


# ---------------------------------------------------------------------------
# Main
# ---------------------------------------------------------------------------

if __name__ == "__main__":
    key = jax.random.PRNGKey(0)
    V, B, D = 3, 16, 128          # 3 relation views, batch 16, per-view dim 128
    H, O = V * D, 128             # mlp_args = (hid_dim=V*D, out_dim)

    ks = jax.random.split(key, 6)
    features = jax.random.normal(ks[0], (V, B, D), jnp.float32)
    thresholds = jax.nn.softmax(jax.random.normal(ks[1], (V, 1)), axis=0).astype(jnp.float32)

    # Deterministic synthetic parameters (shapes from nn.Sequential in __init__).
    params_f32 = {
        "w1": (jax.random.normal(ks[2], (H, H), jnp.float32) / jnp.sqrt(H)),   # Linear(H,H).weight.T
        "b1": jax.random.normal(ks[3], (1, H), jnp.float32) * 0.01,
        "gamma": jnp.ones((1, H), jnp.float32),                                # BatchNorm1d(H)
        "beta": jnp.zeros((1, H), jnp.float32),
        "w2": (jax.random.normal(ks[4], (H, O), jnp.float32) / jnp.sqrt(H)),   # Linear(H,O).weight.T
        "b2": jax.random.normal(ks[5], (1, O), jnp.float32) * 0.01,
    }
    # One-time bf16 cast of the MXU weights (off the per-call hot path).
    params = prepare_mlp_params(params_f32)

    opts = ("cat_wo_avg", "cat_w_avg", "cat_w_avg_mlp", "cat_wo_avg_mlp",
            "add_wo_avg", "add_w_avg")
    outs = {o: inter_agg(features, thresholds, o, params) for o in opts}
    jax.block_until_ready(outs)

    # Sanity check against pure-JAX f32 reference (mlp branches run bf16 MXU
    # matmuls with f32 accumulation, hence the looser tolerance).
    for o in opts:
        ref = inter_agg_ref(features, thresholds, o, params_f32)
        tol = 5e-2 if "mlp" in o else 1e-5
        assert jnp.allclose(outs[o], ref, atol=tol, rtol=tol), f"mismatch in {o}"

    print("KERNEL_OK")
</pallas_src>

<mosaic_0001>
module attributes {stable_mosaic.version = 11 : i64} {
  func.func @_cat_copy_kernel(%arg0: i32, %arg1: memref<3x16x128xf32, #tpu.memory_space<vmem>>, %arg2: memref<16x384xf32, #tpu.memory_space<vmem>>) attributes {dimension_semantics = [#tpu.dimension_semantics<parallel>], iteration_bounds = array<i64: 1>, scalar_prefetch = 0 : i64, scratch_operands = 0 : i64, tpu.core_type = #tpu.core_type<tc>, window_params = [{transform_indices = @transform_0, window_bounds = array<i64: 3, 16, 128>}, {transform_indices = @transform_1, window_bounds = array<i64: 16, 384>}]} {
    %c0 = arith.constant 0 : index
    %c0_0 = arith.constant 0 : index
    %c0_1 = arith.constant 0 : index
    %0 = vector.load %arg1[%c0, %c0_0, %c0_1] : memref<3x16x128xf32, #tpu.memory_space<vmem>>, vector<1x16x128xf32>
    %1 = vector.shape_cast %0 : vector<1x16x128xf32> to vector<16x128xf32>
    %c0_2 = arith.constant 0 : index
    %c0_3 = arith.constant 0 : index
    %2 = vector.load %arg2[%c0_2, %c0_3] : memref<16x384xf32, #tpu.memory_space<vmem>>, vector<16x128xf32>
    tpu.vector_store %arg2[%c0_2, %c0_3], %1 {strides = array<i32>} : memref<16x384xf32, #tpu.memory_space<vmem>>, vector<16x128xf32>,
    %c1 = arith.constant 1 : index
    %c0_4 = arith.constant 0 : index
    %c0_5 = arith.constant 0 : index
    %3 = vector.load %arg1[%c1, %c0_4, %c0_5] : memref<3x16x128xf32, #tpu.memory_space<vmem>>, vector<1x16x128xf32>
    %4 = vector.shape_cast %3 : vector<1x16x128xf32> to vector<16x128xf32>
    %c0_6 = arith.constant 0 : index
    %c128 = arith.constant 128 : index
    %5 = vector.load %arg2[%c0_6, %c128] : memref<16x384xf32, #tpu.memory_space<vmem>>, vector<16x128xf32>
    tpu.vector_store %arg2[%c0_6, %c128], %4 {strides = array<i32>} : memref<16x384xf32, #tpu.memory_space<vmem>>, vector<16x128xf32>,
    %c2 = arith.constant 2 : index
    %c0_7 = arith.constant 0 : index
    %c0_8 = arith.constant 0 : index
    %6 = vector.load %arg1[%c2, %c0_7, %c0_8] : memref<3x16x128xf32, #tpu.memory_space<vmem>>, vector<1x16x128xf32>
    %7 = vector.shape_cast %6 : vector<1x16x128xf32> to vector<16x128xf32>
    %c0_9 = arith.constant 0 : index
    %c256 = arith.constant 256 : index
    %8 = vector.load %arg2[%c0_9, %c256] : memref<16x384xf32, #tpu.memory_space<vmem>>, vector<16x128xf32>
    tpu.vector_store %arg2[%c0_9, %c256], %7 {strides = array<i32>} : memref<16x384xf32, #tpu.memory_space<vmem>>, vector<16x128xf32>,
    return
  }
  func.func @transform_0(%arg0: i32) -> (i32, i32, i32) {
    %c0_i32 = arith.constant 0 : i32
    %c0_i32_0 = arith.constant 0 : i32
    %c0_i32_1 = arith.constant 0 : i32
    return %c0_i32, %arg0, %c0_i32_0 : i32, i32, i32
  }
  func.func @transform_1(%arg0: i32) -> (i32, i32) {
    %c0_i32 = arith.constant 0 : i32
    %c0_i32_0 = arith.constant 0 : i32
    return %arg0, %c0_i32 : i32, i32
  }
}

</mosaic_0001>

<llo_original>
// kernel: tpu_custom_call.1
$region0: #{tpu_custom_call.1}
  #allocation0 [shape = 'u32[]', space=smem, size = 0x4, offset = 0x4, fixed_abs, tag = 'smem constant byte address 0x4 - core index']
  #allocation1 [shape = 'u32[144,128]{1,0:T(1,128)}', space=vmem, size = 0x12000, scoped, tag = 'internal scratch']
  %s0 = inlined_call_operand.hbm [shape: f32[3,16,128], index: 0, kind: input, shape index: {}]
  %s1 = inlined_call_operand.hbm [shape: f32[16,384], index: 1, kind: output, shape index: {}]
  %s2 = sld [smem:[#allocation0]]
  $region18: #{tpu_custom_call.1} parent=0
    _
  %s4 = ssub.s32 1, %s2
  %s5 = scalar_select 0, %s4, %s2
  $region1: #{tpu_custom_call.1} parent=0
    #allocation2 [shape = 'u8[24576]{0}', space=vmem, size = 0x6000, scoped, tag = 'input window, operand 0, single buffered']
    #allocation3 [shape = 's32[1]{0}', space=sflag, size = 0x4, scoped, tag = 'scoped memory for tpu_custom_call.1']
    #allocation4 [shape = 's32[1]{0}', space=sflag, size = 0x4, scoped, tag = 'scoped memory for tpu_custom_call.1']
    #allocation5 [shape = 'u8[24576]{0}', space=vmem, size = 0x6000, scoped, tag = 'output window, operand 0, single buffered']
    %6 = vsyncpa [#allocation3], 0
    %7 = vsyncpa [#allocation4], 0
    // Predicated region
    $region2: #{tpu_custom_call.1} parent=1 // pred_check
      _
    $region3: #{tpu_custom_call.1} parent=1 // pred_check_branch
      %9 = sbr.rel (0) target = $region5
    $region4: #{tpu_custom_call.1} parent=1 // pred_region
      %s11 = ssub.s32 768, 768
      %12 = vsyncadd [#allocation3], %s11
      %s13 = sshll.u32 [#allocation2], 4
      %s14 = int_to_ptr.vmem [resolvable:$true] %s13
      %19 = dma.hbm_to_vmem [thread:$0]  %s0, 768, %s14, [#allocation3], 128, 128, 8
    $region5: #{tpu_custom_call.1} parent=1 // pred_fallthru
      _
    // Predicated region
    $region6: #{tpu_custom_call.1} parent=1 // pred_check
      _
    $region7: #{tpu_custom_call.1} parent=1 // pred_check_branch
      %21 = sbr.rel (0) target = $region9
    $region8: #{tpu_custom_call.1} parent=1 // pred_region
      %22 = dma.done [#allocation3], 768
    $region9: #{tpu_custom_call.1} parent=1 // pred_fallthru
      _
    %v23 = vld [vmem:[#allocation2] sm:$0xff]
    %v24 = vld [vmem:[#allocation2 + $0x8] sm:$0xff]
    %25 = vst [vmem:[#allocation5] sm:$0xff] %v23
    %26 = vst [vmem:[#allocation5 + $0x18] sm:$0xff] %v24
    %s27 = scalar_lea.vmem [#allocation2], 16
    %v28 = vld [vmem:[%s27] sm:$0xff]
    %v29 = vld [vmem:[%s27 + $0x8] sm:$0xff]
    %30 = vst [vmem:[#allocation5 + $0x8] sm:$0xff] %v28
    %31 = vst [vmem:[#allocation5 + $0x20] sm:$0xff] %v29
    %s32 = scalar_lea.vmem [#allocation2], 32
    %v33 = vld [vmem:[%s32] sm:$0xff]
    %v34 = vld [vmem:[%s32 + $0x8] sm:$0xff]
    %35 = vst [vmem:[#allocation5 + $0x10] sm:$0xff] %v33
    %36 = vst [vmem:[#allocation5 + $0x28] sm:$0xff] %v34
    // Predicated region
    $region10: #{tpu_custom_call.1} parent=1 // pred_check
      _
    $region11: #{tpu_custom_call.1} parent=1 // pred_check_branch
      %38 = sbr.rel (0) target = $region13
    $region12: #{tpu_custom_call.1} parent=1 // pred_region
      %s40 = ssub.s32 768, 768
      %41 = vsyncadd [#allocation4], %s40
      %s42 = sshll.u32 [#allocation5], 4
      %s43 = int_to_ptr.vmem [resolvable:$true] %s42
      %48 = dma.vmem_to_hbm [thread:$0]  %s43, 768, %s1, [#allocation4], 384, 384, 24
    $region13: #{tpu_custom_call.1} parent=1 // pred_fallthru
      _
    // Predicated region
    $region14: #{tpu_custom_call.1} parent=1 // pred_check
      _
    $region15: #{tpu_custom_call.1} parent=1 // pred_check_branch
      %50 = sbr.rel (0) target = $region17
    $region16: #{tpu_custom_call.1} parent=1 // pred_region
      %51 = dma.done [#allocation4], 768
    $region17: #{tpu_custom_call.1} parent=1 // pred_fallthru
      _
    %52 = vsyncpa [#allocation3], 1
    %53 = vsyncpa [#allocation4], 1

</llo_original>
